<compile_context>
chip_gen: v7x
topology: tpu7x:2x2x1
jax: 0.10.0
libtpu: 0.0.40
codegen_flags: <defaults>
</compile_context>

<pallas_src>
import jax
import jax.numpy as jnp
from jax import lax
from jax.experimental import pallas as pl
from jax.experimental.pallas import tpu as pltpu

EPS = 1e-5


def _aiaw_kernel(margin_ref, nrc_ref, fm_ref, smask_ref, emask_ref,
                 out_ref, acc_ref):
    k = pl.program_id(1)

    @pl.when(k == 0)
    def _():
        acc_ref[...] = jnp.zeros_like(acc_ref)

    fm = fm_ref[...]                                   # (C, hw_chunk)
    # Gram update: A . A^T via dot_general (both contractions on axis 1);
    # MXU-native, avoids an explicit transposed copy of the largest tile.
    acc_ref[...] += lax.dot_general(
        fm, fm,
        dimension_numbers=(((1,), (1,)), ((), ())),
        preferred_element_type=jnp.float32)

    @pl.when(k == pl.num_programs(1) - 1)
    def _():
        # (gram/(HW-1) + EPS*eye) * mask  ==  gram*scaled_mask + eps_eye_mask
        masked = acc_ref[...] * smask_ref[...] + emask_ref[...]
        off_diag_sum = jnp.sum(jnp.abs(masked)) - margin_ref[0]
        loss_b = jnp.maximum(off_diag_sum / nrc_ref[0], jnp.float32(0.0))
        out_ref[...] = jnp.full(out_ref.shape, loss_b, dtype=out_ref.dtype)


def _choose_hw_chunk(C, HW, itemsize, budget_bytes=4 << 20):
    """Largest lane-aligned chunk of HW that divides HW and keeps one
    double-buffered (C, chunk) tile well under the smallest scoped VMEM
    budget (v5e 16 MiB default, v7x 64 MiB physical)."""
    if HW % 128 != 0:
        return HW                      # full-dim block is always legal
    tk = (budget_bytes // max(C * itemsize, 1)) // 128 * 128
    tk = max(128, min(tk, HW))
    while HW % tk != 0:                # terminates at 128 (128 | HW here)
        tk -= 128
    return tk


def aiaw_loss_no_low_high(f_map, eye, mask_matrix, margin, num_remove_cov,
                          *, hw_chunk=None):
    """JAX/Pallas equivalent of AIAWLoss_NO_LOW_HIGH.forward.

    f_map:          (B, C, H, W)
    eye:            (C, C)  identity used in the covariance regularizer
    mask_matrix:    (C, C) or (num_gpus*C, C)
    margin:         scalar
    num_remove_cov: scalar
    returns:        scalar float32 loss
    """
    B, C, H, W = f_map.shape
    HW = H * W

    # PyTorch glue: average mask over the gpu dimension if oversized.
    mask_matrix = jnp.asarray(mask_matrix, jnp.float32)
    if mask_matrix.shape[0] > C:
        num_gpus = mask_matrix.shape[0] // C
        mask_matrix = mask_matrix.reshape(num_gpus, C, C).mean(axis=0)

    # PyTorch glue: recreate eye if the shape mismatches.
    eye = jnp.asarray(eye, jnp.float32)
    if eye.shape != (C, C):
        eye = jnp.eye(C, dtype=jnp.float32)

    # Keep bf16 inputs in bf16 (kernel is HBM-bound); anything else -> f32.
    f_map = jnp.asarray(f_map)
    if f_map.dtype not in (jnp.bfloat16, jnp.float32):
        f_map = f_map.astype(jnp.float32)
    fm_flat = f_map.reshape(B, C, HW)

    # Fold 1/(HW-1) and EPS*eye into the (tiny) masks on the wrapper side.
    scaled_mask = mask_matrix / jnp.float32(HW - 1)
    eps_eye_mask = jnp.float32(EPS) * eye * mask_matrix

    margin_arr = jnp.asarray(margin, jnp.float32).reshape(1)
    nrc_arr = jnp.asarray(num_remove_cov, jnp.float32).reshape(1)

    if hw_chunk is None:
        hw_chunk = _choose_hw_chunk(C, HW, fm_flat.dtype.itemsize)
    assert HW % hw_chunk == 0, (HW, hw_chunk)
    nk = HW // hw_chunk

    out = pl.pallas_call(
        _aiaw_kernel,
        out_shape=jax.ShapeDtypeStruct((B, 1, 128), jnp.float32),
        grid=(B, nk),
        in_specs=[
            pl.BlockSpec(memory_space=pltpu.SMEM),                       # margin
            pl.BlockSpec(memory_space=pltpu.SMEM),                       # num_remove_cov
            pl.BlockSpec((None, C, hw_chunk), lambda b, k: (b, 0, k)),   # f_map chunk
            pl.BlockSpec((C, C), lambda b, k: (0, 0)),                   # mask/(HW-1)
            pl.BlockSpec((C, C), lambda b, k: (0, 0)),                   # EPS*eye*mask
        ],
        out_specs=pl.BlockSpec((None, 1, 128), lambda b, k: (b, 0, 0)),
        scratch_shapes=[pltpu.VMEM((C, C), jnp.float32)],
        compiler_params=pltpu.CompilerParams(
            dimension_semantics=("parallel", "arbitrary")),
    )(margin_arr, nrc_arr, fm_flat, scaled_mask, eps_eye_mask)

    return jnp.sum(out[:, 0, 0]) / jnp.float32(B)


def _reference(f_map, eye, mask_matrix, margin, num_remove_cov):
    B, C, H, W = f_map.shape
    HW = H * W
    if mask_matrix.shape[0] > C:
        num_gpus = mask_matrix.shape[0] // C
        mask_matrix = mask_matrix.reshape(num_gpus, C, C).mean(axis=0)
    if eye.shape != (C, C):
        eye = jnp.eye(C, dtype=jnp.float32)
    fm = f_map.reshape(B, C, HW).astype(jnp.float32)
    f_cov = jnp.einsum("bcx,bdx->bcd", fm, fm) / (HW - 1) + EPS * eye
    f_cov_masked = f_cov * mask_matrix
    off_diag_sum = jnp.sum(jnp.abs(f_cov_masked), axis=(1, 2), keepdims=True) - margin
    loss = jnp.maximum(off_diag_sum / num_remove_cov, 0.0)
    return jnp.sum(loss) / B


if __name__ == "__main__":
    key = jax.random.PRNGKey(0)
    k1, k2 = jax.random.split(key)

    B, C, H, W = 2, 8, 16, 16
    num_gpus = 2

    f_map = jax.random.normal(k1, (B, C, H, W), dtype=jnp.float32)
    eye = jnp.eye(C, dtype=jnp.float32)
    # mask with size(0) > C to exercise the num_gpus averaging branch
    mask_matrix = (jax.random.uniform(k2, (num_gpus * C, C), dtype=jnp.float32) > 0.5
                   ).astype(jnp.float32)
    margin = jnp.float32(0.1)
    num_remove_cov = jnp.float32(float(C * C))

    # hw_chunk=128 exercises the tiled HW reduction (HW=256 -> 2 chunks).
    loss = aiaw_loss_no_low_high(f_map, eye, mask_matrix, margin,
                                 num_remove_cov, hw_chunk=128)
    loss = jax.block_until_ready(loss)

    ref = _reference(f_map, eye, mask_matrix, margin, num_remove_cov)
    assert jnp.allclose(loss, ref, rtol=1e-5, atol=1e-5), (loss, ref)

    print("KERNEL_OK")
</pallas_src>

<mosaic_0001>
module attributes {stable_mosaic.version = 11 : i64} {
  func.func @_aiaw_kernel(%arg0: i32, %arg1: i32, %arg2: memref<1xf32, #tpu.memory_space<smem>>, %arg3: memref<1xf32, #tpu.memory_space<smem>>, %arg4: memref<1x8x128xf32, #tpu.memory_space<vmem>>, %arg5: memref<8x8xf32, #tpu.memory_space<vmem>>, %arg6: memref<8x8xf32, #tpu.memory_space<vmem>>, %arg7: memref<1x1x128xf32, #tpu.memory_space<vmem>>, %arg8: memref<8x8xf32, #tpu.memory_space<vmem>>) attributes {dimension_semantics = [#tpu.dimension_semantics<parallel>, #tpu.dimension_semantics<arbitrary>], iteration_bounds = array<i64: 2, 2>, scalar_prefetch = 0 : i64, scratch_operands = 1 : i64, tpu.core_type = #tpu.core_type<tc>, window_params = [{transform_indices = @transform_0, window_bounds = array<i64: 1>}, {transform_indices = @transform_1, window_bounds = array<i64: 1>}, {transform_indices = @transform_2, window_bounds = array<i64: 1, 8, 128>}, {pipeline_mode = #tpu.pipeline_mode<synchronous>, transform_indices = @transform_3, window_bounds = array<i64: 8, 8>}, {pipeline_mode = #tpu.pipeline_mode<synchronous>, transform_indices = @transform_4, window_bounds = array<i64: 8, 8>}, {transform_indices = @transform_5, window_bounds = array<i64: 1, 1, 128>}]} {
    %c0_i32 = arith.constant 0 : i32
    %0 = arith.cmpi eq, %arg1, %c0_i32 : i32
    %1 = arith.extui %0 : i1 to i32
    %c0_i32_0 = arith.constant 0 : i32
    %2 = arith.cmpi ne, %1, %c0_i32_0 : i32
    scf.if %2 {
      %cst_8 = arith.constant 0.000000e+00 : f32
      %12 = vector.broadcast %cst_8 : f32 to vector<8x8xf32>
      %c0_9 = arith.constant 0 : index
      %c0_10 = arith.constant 0 : index
      %13 = vector.load %arg8[%c0_9, %c0_10] : memref<8x8xf32, #tpu.memory_space<vmem>>, vector<8x8xf32>
      tpu.vector_store %arg8[%c0_9, %c0_10], %12 {strides = array<i32>} : memref<8x8xf32, #tpu.memory_space<vmem>>, vector<8x8xf32>,
    } else {
    }
    %c0 = arith.constant 0 : index
    %c0_1 = arith.constant 0 : index
    %c0_2 = arith.constant 0 : index
    %3 = vector.load %arg4[%c0, %c0_1, %c0_2] : memref<1x8x128xf32, #tpu.memory_space<vmem>>, vector<1x8x128xf32>
    %4 = vector.shape_cast %3 : vector<1x8x128xf32> to vector<8x128xf32>
    %c0_3 = arith.constant 0 : index
    %c0_4 = arith.constant 0 : index
    %5 = vector.load %arg8[%c0_3, %c0_4] : memref<8x8xf32, #tpu.memory_space<vmem>>, vector<8x8xf32>
    %cst = arith.constant dense<0.000000e+00> : vector<8x8xf32>
    %6 = tpu.matmul %4, %4, %cst {dimension_numbers = #tpu.dot_dimension_numbers<[1], [1], [0], [0], [0, 0, 1, 0], [], []>} : vector<8x128xf32>, vector<8x128xf32>, vector<8x8xf32> -> vector<8x8xf32>
    %7 = arith.addf %5, %6 : vector<8x8xf32>
    %c0_5 = arith.constant 0 : index
    %c0_6 = arith.constant 0 : index
    %8 = vector.load %arg8[%c0_5, %c0_6] : memref<8x8xf32, #tpu.memory_space<vmem>>, vector<8x8xf32>
    tpu.vector_store %arg8[%c0_5, %c0_6], %7 {strides = array<i32>} : memref<8x8xf32, #tpu.memory_space<vmem>>, vector<8x8xf32>,
    %c1_i32 = arith.constant 1 : i32
    %9 = arith.cmpi eq, %arg1, %c1_i32 : i32
    %10 = arith.extui %9 : i1 to i32
    %c0_i32_7 = arith.constant 0 : i32
    %11 = arith.cmpi ne, %10, %c0_i32_7 : i32
    scf.if %11 {
      %c0_8 = arith.constant 0 : index
      %c0_9 = arith.constant 0 : index
      %12 = vector.load %arg8[%c0_8, %c0_9] : memref<8x8xf32, #tpu.memory_space<vmem>>, vector<8x8xf32>
      %c0_10 = arith.constant 0 : index
      %c0_11 = arith.constant 0 : index
      %13 = vector.load %arg5[%c0_10, %c0_11] : memref<8x8xf32, #tpu.memory_space<vmem>>, vector<8x8xf32>
      %14 = arith.mulf %12, %13 : vector<8x8xf32>
      %c0_12 = arith.constant 0 : index
      %c0_13 = arith.constant 0 : index
      %15 = vector.load %arg6[%c0_12, %c0_13] : memref<8x8xf32, #tpu.memory_space<vmem>>, vector<8x8xf32>
      %16 = arith.addf %14, %15 : vector<8x8xf32>
      %17 = math.absf %16 : vector<8x8xf32>
      %18 = vector.shape_cast %17 : vector<8x8xf32> to vector<1x8x8xf32>
      %cst_14 = arith.constant dense<0.000000e+00> : vector<1xf32>
      %19 = vector.multi_reduction <add>, %18, %cst_14 [1, 2] : vector<1x8x8xf32> to vector<1xf32>
      %20 = vector.shape_cast %19 : vector<1xf32> to vector<1x1x1xf32>
      %21 = vector.extract %20[0, 0, 0] : f32 from vector<1x1x1xf32>
      %c0_15 = arith.constant 0 : index
      %22 = memref.load %arg2[%c0_15] : memref<1xf32, #tpu.memory_space<smem>>
      %23 = arith.subf %21, %22 : f32
      %c0_16 = arith.constant 0 : index
      %24 = memref.load %arg3[%c0_16] : memref<1xf32, #tpu.memory_space<smem>>
      %25 = arith.divf %23, %24 : f32
      %cst_17 = arith.constant 0.000000e+00 : f32
      %26 = arith.maximumf %25, %cst_17 : f32
      %27 = vector.broadcast %26 : f32 to vector<1x128xf32>
      %c0_18 = arith.constant 0 : index
      %c0_19 = arith.constant 0 : index
      %c0_20 = arith.constant 0 : index
      %28 = vector.load %arg7[%c0_18, %c0_19, %c0_20] : memref<1x1x128xf32, #tpu.memory_space<vmem>>, vector<1x1x128xf32>
      %29 = vector.shape_cast %28 : vector<1x1x128xf32> to vector<1x128xf32>
      %30 = vector.shape_cast %27 : vector<1x128xf32> to vector<1x1x128xf32>
      tpu.vector_store %arg7[%c0_18, %c0_19, %c0_20], %30 {strides = array<i32>} : memref<1x1x128xf32, #tpu.memory_space<vmem>>, vector<1x1x128xf32>,
    } else {
    }
    return
  }
  func.func @transform_0(%arg0: i32, %arg1: i32) -> i32 {
    %c0_i32 = arith.constant 0 : i32
    %c0_i32_0 = arith.constant 0 : i32
    return %c0_i32 : i32
  }
  func.func @transform_1(%arg0: i32, %arg1: i32) -> i32 {
    %c0_i32 = arith.constant 0 : i32
    %c0_i32_0 = arith.constant 0 : i32
    return %c0_i32 : i32
  }
  func.func @transform_2(%arg0: i32, %arg1: i32) -> (i32, i32, i32) {
    %c0_i32 = arith.constant 0 : i32
    %c0_i32_0 = arith.constant 0 : i32
    return %arg0, %c0_i32, %arg1 : i32, i32, i32
  }
  func.func @transform_3(%arg0: i32, %arg1: i32) -> (i32, i32) {
    %c0_i32 = arith.constant 0 : i32
    %c0_i32_0 = arith.constant 0 : i32
    %c0_i32_1 = arith.constant 0 : i32
    return %c0_i32, %c0_i32_0 : i32, i32
  }
  func.func @transform_4(%arg0: i32, %arg1: i32) -> (i32, i32) {
    %c0_i32 = arith.constant 0 : i32
    %c0_i32_0 = arith.constant 0 : i32
    %c0_i32_1 = arith.constant 0 : i32
    return %c0_i32, %c0_i32_0 : i32, i32
  }
  func.func @transform_5(%arg0: i32, %arg1: i32) -> (i32, i32, i32) {
    %c0_i32 = arith.constant 0 : i32
    %c0_i32_0 = arith.constant 0 : i32
    %c0_i32_1 = arith.constant 0 : i32
    return %arg0, %c0_i32, %c0_i32_0 : i32, i32, i32
  }
}

</mosaic_0001>

<llo_original>
// kernel: tpu_custom_call.1
$region0: #{tpu_custom_call.1}
  #allocation0 [shape = 'u32[]', space=smem, size = 0x4, offset = 0x4, fixed_abs, tag = 'smem constant byte address 0x4 - core index']
  #allocation1 [shape = 'u32[144,128]{1,0:T(1,128)}', space=vmem, size = 0x12000, scoped, tag = 'internal scratch']
  #allocation2 [shape = 'f32[8,8]{1,0:T(8,128)}', space=vmem, size = 0x1000, scoped, tag = 'scratch operand']
  #allocation3 [shape = 'f32[1]{0:T(128)S(6)}', space=smem, size = 0x200, scoped, tag = 'scoped memory for tpu_custom_call.1']
  #allocation4 [shape = 'f32[1]{0:T(128)S(6)}', space=smem, size = 0x200, scoped, tag = 'scoped memory for tpu_custom_call.1']
  %s0 = inlined_call_operand.<no memory space> [shape: f32[1], index: 0, kind: input, shape index: {}]
  %s1 = inlined_call_operand.<no memory space> [shape: f32[1], index: 1, kind: input, shape index: {}]
  %s2 = inlined_call_operand.hbm [shape: f32[2,8,256], index: 2, kind: input, shape index: {}]
  %s3 = inlined_call_operand.vmem [shape: f32[8,8], index: 3, kind: input, shape index: {}]
  %s4 = inlined_call_operand.hbm [shape: f32[8,8], index: 4, kind: input, shape index: {}]
  %s5 = inlined_call_operand.hbm [shape: f32[2,1,128], index: 5, kind: output, shape index: {}]
  %s6 = sld [smem:[#allocation0]]
  $region69: #{tpu_custom_call.1} parent=0
    _
  %s8 = ssub.s32 1, %s6
  %s9 = scalar_select 0, %s8, %s6
  %10 = sst [smem:[#allocation3]] %s0
  %11 = sst [smem:[#allocation4]] %s1
  $region1: #{tpu_custom_call.1} parent=0
    #allocation5 [shape = 'u8[8192]{0}', space=vmem, size = 0x2000, scoped, tag = 'input window, operand 2']
    #allocation6 [shape = 's32[2]{0}', space=sflag, size = 0x8, scoped, tag = 'scoped memory for tpu_custom_call.1']
    #allocation7 [shape = 's32[2]{0}', space=sflag, size = 0x8, scoped, tag = 'scoped memory for tpu_custom_call.1']
    #allocation8 [shape = 'u8[4096]{0}', space=vmem, size = 0x1000, scoped, tag = 'input window, operand 4, single buffered']
    #allocation9 [shape = 's32[1]{0}', space=sflag, size = 0x4, scoped, tag = 'scoped memory for tpu_custom_call.1']
    #allocation10 [shape = 'u8[1024]{0}', space=vmem, size = 0x400, scoped, tag = 'output window, operand 0']
    %12 = vsyncpa [#allocation6], 0
    %s13 = scalar_lea.sflag [#allocation6], 1
    %14 = vsyncpa %s13, 0
    %15 = vsyncpa [#allocation9], 0
    %16 = vsyncpa [#allocation7], 0
    %s17 = scalar_lea.sflag [#allocation7], 1
    %18 = vsyncpa %s17, 0
    loop: start=0, step=1, limit=6
    $region2: #{tpu_custom_call.1} parent=1 // loop_pre_header
      _
    $region3: #{tpu_custom_call.1} parent=1 // loop_header
      %s20 = sphi 0, %s24
      %p21 = scmp.ge.s32.totalorder %s20, 6
      %s27 = sphi 0, %s39
      %s28 = sphi 0, %s35
      %s29 = sphi 0, %s27
      %s30 = sphi 0, %s28
      %s31 = sphi 0, %s29
      %s32 = sphi 0, %s30
      %s40 = sphi 0, %s40
      %s42 = sphi 0, %s40
      %s43 = sphi 0, %s42
      %s57 = sphi 0, %s43
      %s61 = sphi 0, %s61
      %s63 = sphi 0, %s61
      %s64 = sphi 0, %s63
      %s78 = sphi 0, %s64
      %s86 = sphi 0, %s88
      %s89 = sphi 0, %s86
      %s90 = sphi 0, %s89
      %s106 = sphi 0, %s90
      %s110 = sphi 0, %s110
      %s112 = sphi 0, %s110
      %s113 = sphi 0, %s112
      %s127 = sphi 0, %s113
      %s131 = sphi 0, %s131
      %s133 = sphi 0, %s131
      %s134 = sphi 0, %s133
      %s148 = sphi 0, %s134
      %s154 = sphi 0, %s156
      %s157 = sphi 0, %s154
      %s158 = sphi 0, %s157
      %s174 = sphi 0, %s158
    $region4: #{tpu_custom_call.1} parent=1 // loop_header_branch
      %23 = sbr.rel (%p21) target = $region8
    $region5: #{tpu_custom_call.1} parent=1 // loop_body
      %s25 = ssub.s32 %s20, 1
      %s26 = ssub.s32 %s20, 2
      %s33 = sadd.s32 1, %s28
      %p34 = scmp.ge.s32.totalorder %s33, 2
      %s35 = scalar_select %p34, 0, %s33
      %s36 = sadd.s32 1, %s27
      %s37 = scalar_select %p34, %s36, %s27
      %p38 = scmp.ge.s32.totalorder %s37, 2
      %s39 = scalar_select %p38, 0, %s37
      %s41 = sadd.s32 %s40, 1
      %p44 = scmp.eq.s32.totalorder %s20, 3
      %p45 = scmp.ne.s32.totalorder %s40, %s42
      %p46 = scmp.eq.s32.totalorder %s20, 0
      %p47 = por %p45, %p46
      %p48 = scmp.ne.s32.totalorder %s40, %s42
      %p49 = scmp.eq.s32.totalorder %s25, 3
      %p50 = por %p48, %p49
      %p51 = scmp.ne.s32.totalorder %s42, %s43
      %p52 = scmp.eq.s32.totalorder %s25, 0
      %p53 = por %p51, %p52
      %p54 = scmp.ne.s32.totalorder %s42, %s43
      %p55 = scmp.eq.s32.totalorder %s26, 3
      %p56 = por %p54, %p55
      %p58 = scmp.ne.s32.totalorder %s43, %s57
      %p59 = scmp.eq.s32.totalorder %s26, 0
      %p60 = por %p58, %p59
      %s62 = sadd.s32 %s61, 1
      %p65 = scmp.eq.s32.totalorder %s20, 3
      %p66 = scmp.ne.s32.totalorder %s61, %s63
      %p67 = scmp.eq.s32.totalorder %s20, 0
      %p68 = por %p66, %p67
      %p69 = scmp.ne.s32.totalorder %s61, %s63
      %p70 = scmp.eq.s32.totalorder %s25, 3
      %p71 = por %p69, %p70
      %p72 = scmp.ne.s32.totalorder %s63, %s64
      %p73 = scmp.eq.s32.totalorder %s25, 0
      %p74 = por %p72, %p73
      %p75 = scmp.ne.s32.totalorder %s63, %s64
      %p76 = scmp.eq.s32.totalorder %s26, 3
      %p77 = por %p75, %p76
      %p79 = scmp.ne.s32.totalorder %s64, %s78
      %p80 = scmp.eq.s32.totalorder %s26, 0
      %p81 = por %p79, %p80
      %s82 = ssub.s32 %s27, %s39
      %s83 = ssub.s32 %s28, %s35
      %s84 = sor.u32 %s82, %s83
      %p85 = scmp.eq.s32.totalorder %s84, 0
      %s87 = sadd.s32 %s86, 1
      %s88 = scalar_select %p85, %s86, %s87
      %p91 = pneg %p85
      %p92 = scmp.eq.s32.totalorder %s20, 3
      %p93 = por %p91, %p92
      %p94 = scmp.ne.s32.totalorder %s86, %s89
      %p95 = scmp.eq.s32.totalorder %s20, 0
      %p96 = por %p94, %p95
      %p97 = scmp.ne.s32.totalorder %s86, %s89
      %p98 = scmp.eq.s32.totalorder %s25, 3
      %p99 = por %p97, %p98
      %p100 = scmp.ne.s32.totalorder %s89, %s90
      %p101 = scmp.eq.s32.totalorder %s25, 0
      %p102 = por %p100, %p101
      %p103 = scmp.ne.s32.totalorder %s89, %s90
      %p104 = scmp.eq.s32.totalorder %s26, 3
      %p105 = por %p103, %p104
      %p107 = scmp.ne.s32.totalorder %s90, %s106
      %p108 = scmp.eq.s32.totalorder %s26, 0
      %p109 = por %p107, %p108
      %s111 = sadd.s32 %s110, 1
      %p114 = scmp.eq.s32.totalorder %s20, 3
      %p115 = scmp.ne.s32.totalorder %s110, %s112
      %p116 = scmp.eq.s32.totalorder %s20, 0
      %p117 = por %p115, %p116
      %p118 = scmp.ne.s32.totalorder %s110, %s112
      %p119 = scmp.eq.s32.totalorder %s25, 3
      %p120 = por %p118, %p119
      %p121 = scmp.ne.s32.totalorder %s112, %s113
      %p122 = scmp.eq.s32.totalorder %s25, 0
      %p123 = por %p121, %p122
      %p124 = scmp.ne.s32.totalorder %s112, %s113
      %p125 = scmp.eq.s32.totalorder %s26, 3
      %p126 = por %p124, %p125
      %p128 = scmp.ne.s32.totalorder %s113, %s127
      %p129 = scmp.eq.s32.totalorder %s26, 0
      %p130 = por %p128, %p129
      %s132 = sadd.s32 %s131, 1
      %p135 = scmp.eq.s32.totalorder %s20, 3
      %p136 = scmp.ne.s32.totalorder %s131, %s133
      %p137 = scmp.eq.s32.totalorder %s20, 0
      %p138 = por %p136, %p137
      %p139 = scmp.ne.s32.totalorder %s131, %s133
      %p140 = scmp.eq.s32.totalorder %s25, 3
      %p141 = por %p139, %p140
      %p142 = scmp.ne.s32.totalorder %s133, %s134
      %p143 = scmp.eq.s32.totalorder %s25, 0
      %p144 = por %p142, %p143
      %p145 = scmp.ne.s32.totalorder %s133, %s134
      %p146 = scmp.eq.s32.totalorder %s26, 3
      %p147 = por %p145, %p146
      %p149 = scmp.ne.s32.totalorder %s134, %s148
      %p150 = scmp.eq.s32.totalorder %s26, 0
      %p151 = por %p149, %p150
      %s152 = ssub.s32 %s27, %s39
      %p153 = scmp.eq.s32.totalorder %s152, 0
      %s155 = sadd.s32 %s154, 1
      %s156 = scalar_select %p153, %s154, %s155
      %p159 = pneg %p153
      %p160 = scmp.eq.s32.totalorder %s20, 3
      %p161 = por %p159, %p160
      %p162 = scmp.ne.s32.totalorder %s154, %s157
      %p163 = scmp.eq.s32.totalorder %s20, 0
      %p164 = por %p162, %p163
      %p165 = scmp.ne.s32.totalorder %s154, %s157
      %p166 = scmp.eq.s32.totalorder %s25, 3
      %p167 = por %p165, %p166
      %p168 = scmp.ne.s32.totalorder %s157, %s158
      %p169 = scmp.eq.s32.totalorder %s25, 0
      %p170 = por %p168, %p169
      %p171 = scmp.ne.s32.totalorder %s157, %s158
      %p172 = scmp.eq.s32.totalorder %s26, 3
      %p173 = por %p171, %p172
      %p175 = scmp.ne.s32.totalorder %s158, %s174
      %p176 = scmp.eq.s32.totalorder %s26, 0
      %p177 = por %p175, %p176
      %p178 = scmp.le.s32.totalorder 1, %s20
      %p179 = scmp.lt.s32.totalorder %s20, 5
      %p180 = pnand %p178, %p179
      %p181 = pneg %p180
      // Predicated region
      $region9: #{tpu_custom_call.1} parent=5 // pred_check
        _
      $region10: #{tpu_custom_call.1} parent=5 // pred_check_branch
        %183 = sbr.rel (%p180) target = $region12
      $region11: #{tpu_custom_call.1} parent=5 // pred_region
        %s184 = ssub.s32 %s20, 1
        // Predicated region
        $region13: #{tpu_custom_call.1} parent=11 // pred_check
          %p185 = pneg %p53
        $region14: #{tpu_custom_call.1} parent=11 // pred_check_branch
          %187 = sbr.rel (%p185) target = $region16
        $region15: #{tpu_custom_call.1} parent=11 // pred_region
          _
        $region16: #{tpu_custom_call.1} parent=11 // pred_fallthru
          _
        // Predicated region
        $region17: #{tpu_custom_call.1} parent=11 // pred_check
          %p188 = pneg %p74
        $region18: #{tpu_custom_call.1} parent=11 // pred_check_branch
          %190 = sbr.rel (%p188) target = $region20
        $region19: #{tpu_custom_call.1} parent=11 // pred_region
          _
        $region20: #{tpu_custom_call.1} parent=11 // pred_fallthru
          _
        // Predicated region
        $region21: #{tpu_custom_call.1} parent=11 // pred_check
          %p191 = pneg %p123
        $region22: #{tpu_custom_call.1} parent=11 // pred_check_branch
          %193 = sbr.rel (%p191) target = $region24
        $region23: #{tpu_custom_call.1} parent=11 // pred_region
          _
        $region24: #{tpu_custom_call.1} parent=11 // pred_fallthru
          _
        // Predicated region
        $region25: #{tpu_custom_call.1} parent=11 // pred_check
          %p194 = pneg %p144
        $region26: #{tpu_custom_call.1} parent=11 // pred_check_branch
          %196 = sbr.rel (%p194) target = $region28
        $region27: #{tpu_custom_call.1} parent=11 // pred_region
          %s198 = ssub.s32 128, 128
          %199 = vsyncadd [#allocation9], %s198
          %s201 = sshll.u32 [#allocation8], 4
          %s202 = int_to_ptr.vmem [resolvable:$true] %s201
          %204 = dma.hbm_to_vmem [thread:$0]  %s4, 128, %s202, [#allocation9]
        $region28: #{tpu_custom_call.1} parent=11 // pred_fallthru
          _
      $region12: #{tpu_custom_call.1} parent=5 // pred_fallthru
        _
      %p205 = scmp.lt.s32.totalorder %s20, 4
      // Predicated region
      $region29: #{tpu_custom_call.1} parent=5 // pred_check
        %p206 = pneg %p205
      $region30: #{tpu_custom_call.1} parent=5 // pred_check_branch
        %208 = sbr.rel (%p206) target = $region32
      $region31: #{tpu_custom_call.1} parent=5 // pred_region
        // Predicated region
        $region33: #{tpu_custom_call.1} parent=31 // pred_check
          %p209 = pneg %p96
        $region34: #{tpu_custom_call.1} parent=31 // pred_check_branch
          %211 = sbr.rel (%p209) target = $region36
        $region35: #{tpu_custom_call.1} parent=31 // pred_region
          %s212 = sand.u32 %s86, 1
          %s213 = scalar_lea.sflag [#allocation6], %s212
          %s214 = sand.u32 %s86, 1
          %s215 = smul.addr %s214, 8
          %s216 = scalar_lea.vmem [#allocation5], %s215
          %s218 = ssub.s32 128, 128
          %219 = vsyncadd %s213, %s218
          %s220 = smul.addr %s27, 2
          %s221 = sadd.s32 %s28, %s220
          %s222 = smul.addr %s221, 128
          %s223 = scalar_lea.hbm %s2, %s222
          %s225 = sshll.u32 %s216, 4
          %s226 = int_to_ptr.vmem [resolvable:$true] %s225
          %228 = dma.hbm_to_vmem [thread:$0]  %s223, 128, %s226, %s213
        $region36: #{tpu_custom_call.1} parent=31 // pred_fallthru
          _
      $region32: #{tpu_custom_call.1} parent=5 // pred_fallthru
        _
      %p229 = scmp.le.s32.totalorder 1, %s20
      %p230 = scmp.lt.s32.totalorder %s20, 5
      %p231 = pnand %p229, %p230
      %p232 = pneg %p231
      // Predicated region
      $region37: #{tpu_custom_call.1} parent=5 // pred_check
        _
      $region38: #{tpu_custom_call.1} parent=5 // pred_check_branch
        %234 = sbr.rel (%p231) target = $region40
      $region39: #{tpu_custom_call.1} parent=5 // pred_region
        %s235 = ssub.s32 %s20, 1
        %s236 = sand.u32 %s89, 1
        %s237 = scalar_lea.sflag [#allocation6], %s236
        %s238 = sand.u32 %s89, 1
        %s239 = smul.addr %s238, 8
        %s240 = scalar_lea.vmem [#allocation5], %s239
        // Predicated region
        $region41: #{tpu_custom_call.1} parent=39 // pred_check
          %p241 = pneg %p102
        $region42: #{tpu_custom_call.1} parent=39 // pred_check_branch
          %243 = sbr.rel (%p241) target = $region44
        $region43: #{tpu_custom_call.1} parent=39 // pred_region
          %244 = dma.done %s237, 128
        $region44: #{tpu_custom_call.1} parent=39 // pred_fallthru
          _
        // Predicated region
        $region45: #{tpu_custom_call.1} parent=39 // pred_check
          %p245 = pneg %p144
        $region46: #{tpu_custom_call.1} parent=39 // pred_check_branch
          %247 = sbr.rel (%p245) target = $region48
        $region47: #{tpu_custom_call.1} parent=39 // pred_region
          %248 = dma.done [#allocation9], 128
        $region48: #{tpu_custom_call.1} parent=39 // pred_fallthru
          _
        %p249 = pneg %p53
        %p250 = pneg %p50
        %p251 = pneg %p74
        %p252 = pneg %p71
        %s253 = sand.u32 %s89, 1
        %s254 = scalar_lea.sflag [#allocation6], %s253
        %s255 = sand.u32 %s89, 1
        %s256 = smul.addr %s255, 8
        %s257 = scalar_lea.vmem [#allocation5], %s256
        %p258 = pneg %p102
        %p259 = pneg %p99
        %p260 = pneg %p123
        %p261 = pneg %p120
        %p262 = pneg %p144
        %p263 = pneg %p141
        %p264 = pneg %p170
        %p265 = pneg %p167
        %s266 = sand.u32 %s157, 1
        %s267 = scalar_lea.sflag [#allocation7], %s266
        %s268 = sand.u32 %s157, 1
        %s269 = scalar_lea.vmem [#allocation10], %s268
        %p270 = scmp.eq.s32.totalorder %s30, 0
        // Predicated region
        $region49: #{tpu_custom_call.1} parent=39 // pred_check
          %p271 = pneg %p270
        $region50: #{tpu_custom_call.1} parent=39 // pred_check_branch
          %273 = sbr.rel (%p271) target = $region52
        $region51: #{tpu_custom_call.1} parent=39 // pred_region
          %vm274 = vcmask 64512
          %275 = vst.msk [vmem:[#allocation2] sm:$0xff] %vm274, 0.0
        $region52: #{tpu_custom_call.1} parent=39 // pred_fallthru
          _
        %v276 = vld [vmem:[%s240] sm:$0xff]
        %v277 = vld [vmem:[#allocation2] sm:$0xff]
        %278 = vmatprep.subr.mxu0 0.0
        %279 = vmatpush1.xpose.msra.mxu0 %v276
        %280 = vmatprep.subr.mxu0 0.0
        %281 = vmatpush1.xpose.msra.mxu0 0.0
        %282 = vmatprep.subr.mxu0 0.0
        %283 = vmatpush1.xpose.msra.mxu0 0.0
        %284 = vmatprep.subr.mxu0 0.0
        %285 = vmatpush1.xpose.msra.mxu0 0.0
        %286 = vmatprep.subr.mxu0 0.0
        %287 = vmatpush1.xpose.msra.mxu0 0.0
        %288 = vmatprep.subr.mxu0 0.0
        %289 = vmatpush1.xpose.msra.mxu0 0.0
        %290 = vmatprep.subr.mxu0 0.0
        %291 = vmatpush1.xpose.msra.mxu0 0.0
        %292 = vmatprep.subr.mxu0 0.0
        %293 = vmatpush1.xpose.msra.mxu0 0.0
        %294 = vmatprep.subr.mxu0 0.0
        %295 = vmatpush1.xpose.msra.mxu0 0.0
        %296 = vmatprep.subr.mxu0 0.0
        %297 = vmatpush1.xpose.msra.mxu0 0.0
        %298 = vmatprep.subr.mxu0 0.0
        %299 = vmatpush1.xpose.msra.mxu0 0.0
        %300 = vmatprep.subr.mxu0 0.0
        %301 = vmatpush1.xpose.msra.mxu0 0.0
        %302 = vmatprep.subr.mxu0 0.0
        %303 = vmatpush1.xpose.msra.mxu0 0.0
        %304 = vmatprep.subr.mxu0 0.0
        %305 = vmatpush1.xpose.msra.mxu0 0.0
        %306 = vmatprep.subr.mxu0 0.0
        %307 = vmatpush1.xpose.msra.mxu0 0.0
        %308 = vmatprep.subr.mxu0 0.0
        %309 = vmatpush1.xpose.msra.mxu0 0.0
        %310 = vmatprep.subr.mxu0 0.0
        %311 = vmatpush1.xpose.msra.mxu0 0.0
        %312 = vmatprep.subr.mxu0 0.0
        %313 = vmatpush1.xpose.msra.mxu0 0.0
        %314 = vmatprep.subr.mxu0 0.0
        %315 = vmatpush1.xpose.msra.mxu0 0.0
        %316 = vmatprep.subr.mxu0 0.0
        %317 = vmatpush1.xpose.msra.mxu0 0.0
        %318 = vmatprep.subr.mxu0 0.0
        %319 = vmatpush1.xpose.msra.mxu0 0.0
        %320 = vmatprep.subr.mxu0 0.0
        %321 = vmatpush1.xpose.msra.mxu0 0.0
        %322 = vmatprep.subr.mxu0 0.0
        %323 = vmatpush1.xpose.msra.mxu0 0.0
        %324 = vmatprep.subr.mxu0 0.0
        %325 = vmatpush1.xpose.msra.mxu0 0.0
        %326 = vmatprep.subr.mxu0 0.0
        %327 = vmatpush1.xpose.msra.mxu0 0.0
        %328 = vmatprep.subr.mxu0 0.0
        %329 = vmatpush1.xpose.msra.mxu0 0.0
        %330 = vmatprep.subr.mxu0 0.0
        %331 = vmatpush1.xpose.msra.mxu0 0.0
        %332 = vmatprep.subr.mxu0 0.0
        %333 = vmatpush1.xpose.msra.mxu0 0.0
        %334 = vmatprep.subr.mxu0 0.0
        %335 = vmatpush1.xpose.msra.mxu0 0.0
        %336 = vmatprep.subr.mxu0 0.0
        %337 = vmatpush1.xpose.msra.mxu0 0.0
        %338 = vmatprep.subr.mxu0 0.0
        %339 = vmatpush1.xpose.msra.mxu0 0.0
        %340 = vmatprep.subr.mxu0 0.0
        %341 = vmatpush1.xpose.msra.mxu0 0.0
        %342 = vmatprep.mubr.f32.mxu0 0.0
        %343 = vmatmul.mubr.f32.gmra.mrb[0].mxu0 %v276
        %v344 = vpop.f32.mrb[0].mxu0
        %v345 = vadd.f32 0.0, %v344
        %v346 = vpop.f32.mrb[0].mxu0
        %347 = vdwg.mxu0
        %v348 = vadd.f32 %v277, %v345
        %vm349 = vcmask 64512
        %350 = vst.msk [vmem:[#allocation2] sm:$0xff] %vm349, %v348
        %p351 = scmp.eq.s32.totalorder %s30, 1
        // Predicated region
        $region53: #{tpu_custom_call.1} parent=39 // pred_check
          %p352 = pneg %p351
        $region54: #{tpu_custom_call.1} parent=39 // pred_check_branch
          %354 = sbr.rel (%p352) target = $region56
        $region55: #{tpu_custom_call.1} parent=39 // pred_region
          %v355 = vld [vmem:[#allocation2] sm:$0xff]
          %v356 = vld [vmem:[%s3] sm:$0xff]
          %v357 = vmul.f32 %v355, %v356
          %v358 = vld [vmem:[#allocation8] sm:$0xff]
          %v359 = vadd.f32 %v357, %v358
          %v360 = vand.u32 2147483647, %v359
          %v361 = vsel %vm349, %v360, 0.0
          %362 = vadd.xlane.f32.xlu0 %v361
          %v363 = vpop.xlane.xlu0 %362
          %v364 = vrot.slane %v363, 4
          %v365 = vadd.f32 %v363, %v364
          %v366 = vrot.slane %v365, 2
          %v367 = vadd.f32 %v365, %v366
          %v368 = vrot.slane %v367, 1
          %v369 = vadd.f32 %v367, %v368
          %s370 = vtos %v369
          %s371 = sld [smem:[#allocation3]]
          %s372 = ssub.f32 %s370, %s371
          %s373 = sld [smem:[#allocation4]]
          %v374 = vstv %s373
          %v375 = vrcp.pop %v374
          %s376 = vtos %v375
          %s377 = smul.f32 %s372, %s376
          %s378 = smax.f32 %s377, 0.0
          %v379 = vstv %s378
          %380 = vst [vmem:[%s269] sm:$0x1] %v379
        $region56: #{tpu_custom_call.1} parent=39 // pred_fallthru
          _
        %s381 = sand.u32 %s157, 1
        %s382 = scalar_lea.sflag [#allocation7], %s381
        %s383 = sand.u32 %s157, 1
        %s384 = scalar_lea.vmem [#allocation10], %s383
        // Predicated region
        $region57: #{tpu_custom_call.1} parent=39 // pred_check
          %p385 = pneg %p167
        $region58: #{tpu_custom_call.1} parent=39 // pred_check_branch
          %387 = sbr.rel (%p385) target = $region60
        $region59: #{tpu_custom_call.1} parent=39 // pred_region
          %s389 = ssub.s32 16, 16
          %390 = vsyncadd %s382, %s389
          %s391 = smul.addr %s29, 16
          %s392 = scalar_lea.hbm %s5, %s391
          %s394 = sshll.u32 %s384, 4
          %s395 = int_to_ptr.vmem [resolvable:$true] %s394
          %397 = dma.vmem_to_hbm [thread:$0]  %s395, 16, %s392, %s382
        $region60: #{tpu_custom_call.1} parent=39 // pred_fallthru
          _
      $region40: #{tpu_custom_call.1} parent=5 // pred_fallthru
        _
      %p398 = scmp.le.s32.totalorder 2, %s20
      // Predicated region
      $region61: #{tpu_custom_call.1} parent=5 // pred_check
        %p399 = pneg %p398
      $region62: #{tpu_custom_call.1} parent=5 // pred_check_branch
        %401 = sbr.rel (%p399) target = $region64
      $region63: #{tpu_custom_call.1} parent=5 // pred_region
        %s402 = ssub.s32 %s20, 2
        // Predicated region
        $region65: #{tpu_custom_call.1} parent=63 // pred_check
          %p403 = pneg %p173
        $region66: #{tpu_custom_call.1} parent=63 // pred_check_branch
          %405 = sbr.rel (%p403) target = $region68
        $region67: #{tpu_custom_call.1} parent=63 // pred_region
          %s406 = sand.u32 %s158, 1
          %s407 = scalar_lea.sflag [#allocation7], %s406
          %s408 = sand.u32 %s158, 1
          %s409 = scalar_lea.vmem [#allocation10], %s408
          %410 = dma.done %s407, 16
        $region68: #{tpu_custom_call.1} parent=63 // pred_fallthru
          _
      $region64: #{tpu_custom_call.1} parent=5 // pred_fallthru
        _
    $region6: #{tpu_custom_call.1} parent=1 // loop_footer
      %s24 = sadd.s32 1, %s20
    $region7: #{tpu_custom_call.1} parent=1 // loop_footer_branch
      %19 = sbr.rel target = $region3
    $region8: #{tpu_custom_call.1} parent=1 // loop_exit
      _
    %411 = vsyncpa [#allocation6], 1
    %s412 = scalar_lea.sflag [#allocation6], 1
    %413 = vsyncpa %s412, 1
    %414 = vsyncpa [#allocation9], 1
    %415 = vsyncpa [#allocation7], 1
    %s416 = scalar_lea.sflag [#allocation7], 1
    %417 = vsyncpa %s416, 1

</llo_original>
